<compile_context>
chip_gen: v7x
topology: tpu7x:2x2x1
jax: 0.10.0
libtpu: 0.0.40
codegen_flags: <defaults>
</compile_context>

<pallas_src>
import jax
import jax.numpy as jnp
from jax.experimental import pallas as pl
from jax.experimental.pallas import tpu as pltpu

N_BINS = 32            # input feature dimension of the Linear layer
OUTPUT_FEATURES = 16   # output_features argument of Onset_Stack
FOLD = 8               # rows folded into the lane dimension
SUBLANE = 8            # f32 sublane count
ROW_ALIGN = FOLD * SUBLANE   # 64 original rows = one fully (8,128)-aligned fold


def _onset_stack_kernel(x_ref, w_ref, b_ref, o_ref):
    # x_ref: (tm_f, FOLD*N_BINS)   w_ref: (FOLD*N_BINS, FOLD*OUT)
    # b_ref: (1, FOLD*OUT)         o_ref: (tm_f, FOLD*OUT)
    y = jnp.dot(x_ref[...], w_ref[...], preferred_element_type=jnp.float32)
    y = y + b_ref[...]                           # f32 bias broadcast over rows
    # sigmoid(y) = 1 / (1 + exp(-y)); exp and reciprocal both use the EUP slot
    s = pl.reciprocal(1.0 + jnp.exp(-y), approx=False)
    o_ref[...] = s.astype(o_ref.dtype)


def make_onset_stack(weight, bias, *, tm=4096):
    """Build a jitted forward pass for Onset_Stack.

    weight: (out_features, N_BINS)  -- PyTorch nn.Linear layout
    bias:   (out_features,)
    tm:     row-tile size in *folded* rows (each folded row = FOLD input rows)
    """
    out_f, nbins = weight.shape
    Kf = FOLD * nbins      # folded input width   (256)
    Nf = FOLD * out_f      # folded output width  (128)

    # Precomputed once: block-diagonal weight kron(I_FOLD, W^T) and tiled bias.
    w_bd = jnp.kron(jnp.eye(FOLD, dtype=weight.dtype), weight.T)        # (Kf, Nf)
    b_f = jnp.tile(bias.astype(jnp.float32), FOLD).reshape(1, Nf)       # (1, Nf) f32

    tm = max(SUBLANE, (int(tm) // SUBLANE) * SUBLANE)   # multiple of 8 sublanes

    @jax.jit
    def forward(x):
        B, T, nb = x.shape
        assert nb == nbins, f"expected last dim {nbins}, got {nb}"
        M = B * T

        # Pad only up to the next multiple of FOLD*8 (fold + sublane alignment);
        # no full-tile padding -- the ragged last grid block is handled by Pallas.
        M_pad = -(-M // ROW_ALIGN) * ROW_ALIGN
        x2 = x.reshape(M, nbins)
        if M_pad != M:
            x2 = jnp.pad(x2, ((0, M_pad - M), (0, 0)))
        Mf = M_pad // FOLD                        # folded rows, multiple of 8
        xf = x2.reshape(Mf, Kf)                   # pure row-major re-view

        tm_f = min(tm, Mf)                        # both multiples of 8
        w = w_bd if w_bd.dtype == x.dtype else w_bd.astype(x.dtype)

        yf = pl.pallas_call(
            _onset_stack_kernel,
            out_shape=jax.ShapeDtypeStruct((Mf, Nf), x.dtype),
            grid_spec=pltpu.PrefetchScalarGridSpec(
                num_scalar_prefetch=0,
                grid=(pl.cdiv(Mf, tm_f),),            # ragged last block OK (rows independent)
                in_specs=[
                    pl.BlockSpec((tm_f, Kf), lambda i: (i, 0)),  # folded x tile
                    pl.BlockSpec((Kf, Nf), lambda i: (0, 0)),    # resident block-diag weight
                    pl.BlockSpec((1, Nf), lambda i: (0, 0)),     # resident tiled bias
                ],
                out_specs=pl.BlockSpec((tm_f, Nf), lambda i: (i, 0)),
            ),
            compiler_params=pltpu.CompilerParams(
                dimension_semantics=("parallel",),    # shards across v7x's 2 TCs
                vmem_limit_bytes=32 * 1024 * 1024,
            ),
        )(xf, w, b_f)

        y2 = yf.reshape(M_pad, out_f)
        if M_pad != M:
            y2 = y2[:M]
        return y2.reshape(B, T, out_f)

    return forward


def _reference(x, weight, bias):
    return jax.nn.sigmoid(
        jnp.einsum("btn,on->bto", x.astype(jnp.float32), weight.astype(jnp.float32))
        + bias.astype(jnp.float32))


if __name__ == "__main__":
    key = jax.random.PRNGKey(0)
    kx, kw, kb, kx2, kx3 = jax.random.split(key, 5)

    weight = jax.random.normal(kw, (OUTPUT_FEATURES, N_BINS), dtype=jnp.float32) * 0.1
    bias = jax.random.normal(kb, (OUTPUT_FEATURES,), dtype=jnp.float32) * 0.1

    # --- case 1: small shape (B=2, T=8), f32, single grid step -----------------
    forward = make_onset_stack(weight, bias)
    x1 = jax.random.normal(kx, (2, 8, N_BINS), dtype=jnp.float32)
    out1 = jax.block_until_ready(forward(x1))
    ref1 = _reference(x1, weight, bias)
    assert out1.shape == (2, 8, OUTPUT_FEATURES)
    assert jnp.allclose(out1, ref1, atol=1e-5, rtol=1e-5), "case 1 mismatch"

    # --- case 2: M not a multiple of 64 + ragged multi-step grid ---------------
    fwd_small_tile = make_onset_stack(weight, bias, tm=24)   # forces 2 grid steps
    x2 = jax.random.normal(kx2, (3, 70, N_BINS), dtype=jnp.float32)   # M = 210
    out2 = jax.block_until_ready(fwd_small_tile(x2))
    ref2 = _reference(x2, weight, bias)
    assert out2.shape == (3, 70, OUTPUT_FEATURES)
    assert jnp.allclose(out2, ref2, atol=1e-5, rtol=1e-5), "case 2 mismatch"

    # --- case 3: bf16 I/O with f32 accumulation inside the kernel --------------
    fwd_bf16 = make_onset_stack(weight.astype(jnp.bfloat16), bias)
    x3 = jax.random.normal(kx3, (2, 128, N_BINS), dtype=jnp.bfloat16)
    out3 = jax.block_until_ready(fwd_bf16(x3))
    ref3 = _reference(x3, weight.astype(jnp.bfloat16), bias)
    assert out3.dtype == jnp.bfloat16
    assert jnp.allclose(out3.astype(jnp.float32), ref3, atol=1e-2, rtol=1e-2), "case 3 mismatch"

    print("KERNEL_OK")
</pallas_src>

<mosaic_0001>
module attributes {stable_mosaic.version = 11 : i64} {
  func.func @_onset_stack_kernel(%arg0: i32, %arg1: memref<8x256xf32, #tpu.memory_space<vmem>>, %arg2: memref<256x128xf32, #tpu.memory_space<vmem>>, %arg3: memref<1x128xf32, #tpu.memory_space<vmem>>, %arg4: memref<8x128xf32, #tpu.memory_space<vmem>>) attributes {dimension_semantics = [#tpu.dimension_semantics<parallel>], iteration_bounds = array<i64: 1>, scalar_prefetch = 0 : i64, scratch_operands = 0 : i64, tpu.core_type = #tpu.core_type<tc>, window_params = [{transform_indices = @transform_0, window_bounds = array<i64: 8, 256>}, {pipeline_mode = #tpu.pipeline_mode<synchronous>, transform_indices = @transform_1, window_bounds = array<i64: 256, 128>}, {pipeline_mode = #tpu.pipeline_mode<synchronous>, transform_indices = @transform_2, window_bounds = array<i64: 1, 128>}, {transform_indices = @transform_3, window_bounds = array<i64: 8, 128>}]} {
    %c0 = arith.constant 0 : index
    %c0_0 = arith.constant 0 : index
    %0 = vector.load %arg1[%c0, %c0_0] : memref<8x256xf32, #tpu.memory_space<vmem>>, vector<8x256xf32>
    %c0_1 = arith.constant 0 : index
    %c0_2 = arith.constant 0 : index
    %1 = vector.load %arg2[%c0_1, %c0_2] : memref<256x128xf32, #tpu.memory_space<vmem>>, vector<256x128xf32>
    %cst = arith.constant dense<0.000000e+00> : vector<8x128xf32>
    %2 = tpu.matmul %0, %1, %cst {dimension_numbers = #tpu.dot_dimension_numbers<[1], [0], [0], [1], [0, 0, 1, 1], [], []>} : vector<8x256xf32>, vector<256x128xf32>, vector<8x128xf32> -> vector<8x128xf32>
    %c0_3 = arith.constant 0 : index
    %c0_4 = arith.constant 0 : index
    %3 = vector.load %arg3[%c0_3, %c0_4] : memref<1x128xf32, #tpu.memory_space<vmem>>, vector<1x128xf32>
    %4 = vector.broadcast %3 : vector<1x128xf32> to vector<8x128xf32>
    %5 = arith.addf %2, %4 : vector<8x128xf32>
    %cst_5 = arith.constant 0.000000e+00 : f32
    %6 = vector.broadcast %cst_5 : f32 to vector<8x128xf32>
    %7 = arith.subf %6, %5 : vector<8x128xf32>
    %8 = math.exp %7 : vector<8x128xf32>
    %cst_6 = arith.constant 1.000000e+00 : f32
    %9 = vector.broadcast %cst_6 : f32 to vector<8x128xf32>
    %10 = arith.addf %9, %8 : vector<8x128xf32>
    %11 = tpu.reciprocal %10 : vector<8x128xf32> -> vector<8x128xf32>
    %c0_7 = arith.constant 0 : index
    %c0_8 = arith.constant 0 : index
    %12 = vector.load %arg4[%c0_7, %c0_8] : memref<8x128xf32, #tpu.memory_space<vmem>>, vector<8x128xf32>
    tpu.vector_store %arg4[%c0_7, %c0_8], %11 {strides = array<i32>} : memref<8x128xf32, #tpu.memory_space<vmem>>, vector<8x128xf32>,
    return
  }
  func.func @transform_0(%arg0: i32) -> (i32, i32) {
    %c0_i32 = arith.constant 0 : i32
    %c0_i32_0 = arith.constant 0 : i32
    return %arg0, %c0_i32 : i32, i32
  }
  func.func @transform_1(%arg0: i32) -> (i32, i32) {
    %c0_i32 = arith.constant 0 : i32
    %c0_i32_0 = arith.constant 0 : i32
    %c0_i32_1 = arith.constant 0 : i32
    return %c0_i32, %c0_i32_0 : i32, i32
  }
  func.func @transform_2(%arg0: i32) -> (i32, i32) {
    %c0_i32 = arith.constant 0 : i32
    %c0_i32_0 = arith.constant 0 : i32
    %c0_i32_1 = arith.constant 0 : i32
    return %c0_i32, %c0_i32_0 : i32, i32
  }
  func.func @transform_3(%arg0: i32) -> (i32, i32) {
    %c0_i32 = arith.constant 0 : i32
    %c0_i32_0 = arith.constant 0 : i32
    return %arg0, %c0_i32 : i32, i32
  }
}

</mosaic_0001>

<llo_original>
// kernel: forward.1
$region0: #{forward.1}
  #allocation0 [shape = 'u32[]', space=smem, size = 0x4, offset = 0x4, fixed_abs, tag = 'smem constant byte address 0x4 - core index']
  #allocation1 [shape = 'u32[144,128]{1,0:T(1,128)}', space=vmem, size = 0x12000, scoped, tag = 'internal scratch']
  %s0 = inlined_call_operand.vmem [shape: f32[8,256], index: 0, kind: input, shape index: {}]
  %s1 = inlined_call_operand.hbm [shape: f32[256,128], index: 1, kind: input, shape index: {}]
  %s2 = inlined_call_operand.vmem [shape: f32[1,128], index: 2, kind: input, shape index: {}]
  %s3 = inlined_call_operand.vmem [shape: f32[8,128], index: 3, kind: output, shape index: {}]
  %s4 = sld [smem:[#allocation0]]
  $region26: #{forward.1} parent=0
    _
  %s6 = ssub.s32 1, %s4
  %s7 = scalar_select 0, %s6, %s4
  $region1: #{forward.1} parent=0
    #allocation2 [shape = 'u8[131072]{0}', space=vmem, size = 0x20000, scoped, tag = 'input window, operand 1, single buffered']
    #allocation3 [shape = 's32[1]{0}', space=sflag, size = 0x4, scoped, tag = 'scoped memory for forward.1']
    %8 = vsyncpa [#allocation3], 0
    // Predicated region
    $region2: #{forward.1} parent=1 // pred_check
      _
    $region3: #{forward.1} parent=1 // pred_check_branch
      %10 = sbr.rel (0) target = $region5
    $region4: #{forward.1} parent=1 // pred_region
      _
    $region5: #{forward.1} parent=1 // pred_fallthru
      _
    // Predicated region
    $region6: #{forward.1} parent=1 // pred_check
      _
    $region7: #{forward.1} parent=1 // pred_check_branch
      %12 = sbr.rel (0) target = $region9
    $region8: #{forward.1} parent=1 // pred_region
      %s14 = ssub.s32 4096, 4096
      %15 = vsyncadd [#allocation3], %s14
      %s16 = sshll.u32 [#allocation2], 4
      %s17 = int_to_ptr.vmem [resolvable:$true] %s16
      %22 = dma.hbm_to_vmem [thread:$0]  %s1, 4096, %s17, [#allocation3], 128, 128, 8
    $region9: #{forward.1} parent=1 // pred_fallthru
      _
    // Predicated region
    $region10: #{forward.1} parent=1 // pred_check
      _
    $region11: #{forward.1} parent=1 // pred_check_branch
      %24 = sbr.rel (0) target = $region13
    $region12: #{forward.1} parent=1 // pred_region
      _
    $region13: #{forward.1} parent=1 // pred_fallthru
      _
    // Predicated region
    $region14: #{forward.1} parent=1 // pred_check
      _
    $region15: #{forward.1} parent=1 // pred_check_branch
      %26 = sbr.rel (0) target = $region17
    $region16: #{forward.1} parent=1 // pred_region
      %27 = dma.done [#allocation3], 4096
    $region17: #{forward.1} parent=1 // pred_fallthru
      _
    %v28 = vld [vmem:[%s0] sm:$0xff]
    %v29 = vld [vmem:[%s0 + $0x8] sm:$0xff]
    %v30 = vld [vmem:[#allocation2] sm:$0xff]
    %v31 = vld [vmem:[#allocation2 + $0x8] sm:$0xff]
    %v32 = vld [vmem:[#allocation2 + $0x10] sm:$0xff]
    %v33 = vld [vmem:[#allocation2 + $0x18] sm:$0xff]
    %v34 = vld [vmem:[#allocation2 + $0x20] sm:$0xff]
    %v35 = vld [vmem:[#allocation2 + $0x28] sm:$0xff]
    %v36 = vld [vmem:[#allocation2 + $0x30] sm:$0xff]
    %v37 = vld [vmem:[#allocation2 + $0x38] sm:$0xff]
    %v38 = vld [vmem:[#allocation2 + $0x40] sm:$0xff]
    %v39 = vld [vmem:[#allocation2 + $0x48] sm:$0xff]
    %v40 = vld [vmem:[#allocation2 + $0x50] sm:$0xff]
    %v41 = vld [vmem:[#allocation2 + $0x58] sm:$0xff]
    %v42 = vld [vmem:[#allocation2 + $0x60] sm:$0xff]
    %v43 = vld [vmem:[#allocation2 + $0x68] sm:$0xff]
    %v44 = vld [vmem:[#allocation2 + $0x70] sm:$0xff]
    %v45 = vld [vmem:[#allocation2 + $0x78] sm:$0xff]
    %v46 = vld [vmem:[#allocation2 + $0x80] sm:$0xff]
    %v47 = vld [vmem:[#allocation2 + $0x88] sm:$0xff]
    %v48 = vld [vmem:[#allocation2 + $0x90] sm:$0xff]
    %v49 = vld [vmem:[#allocation2 + $0x98] sm:$0xff]
    %v50 = vld [vmem:[#allocation2 + $0xa0] sm:$0xff]
    %v51 = vld [vmem:[#allocation2 + $0xa8] sm:$0xff]
    %v52 = vld [vmem:[#allocation2 + $0xb0] sm:$0xff]
    %v53 = vld [vmem:[#allocation2 + $0xb8] sm:$0xff]
    %v54 = vld [vmem:[#allocation2 + $0xc0] sm:$0xff]
    %v55 = vld [vmem:[#allocation2 + $0xc8] sm:$0xff]
    %v56 = vld [vmem:[#allocation2 + $0xd0] sm:$0xff]
    %v57 = vld [vmem:[#allocation2 + $0xd8] sm:$0xff]
    %v58 = vld [vmem:[#allocation2 + $0xe0] sm:$0xff]
    %v59 = vld [vmem:[#allocation2 + $0xe8] sm:$0xff]
    %v60 = vld [vmem:[#allocation2 + $0xf0] sm:$0xff]
    %v61 = vld [vmem:[#allocation2 + $0xf8] sm:$0xff]
    %v62 = vld [vmem:[%s2] sm:$0x1]
    %v64 = vlaneseq
    %v65 = vshrl.u32 %v64, 7
    %v66 = vsub.s32 0, %v65
    %v67 = vrot.slane %v62, %v66
    %69 = vmatprep.subr.mxu0 0.0
    %70 = vmatpush1.msra.mxu0 %v30
    %71 = vmatprep.subr.mxu0 0.0
    %72 = vmatpush1.msra.mxu0 %v31
    %73 = vmatprep.subr.mxu0 0.0
    %74 = vmatpush1.msra.mxu0 %v32
    %75 = vmatprep.subr.mxu0 0.0
    %76 = vmatpush1.msra.mxu0 %v33
    %77 = vmatprep.subr.mxu0 0.0
    %78 = vmatpush1.msra.mxu0 %v34
    %79 = vmatprep.subr.mxu0 0.0
    %80 = vmatpush1.msra.mxu0 %v35
    %81 = vmatprep.subr.mxu0 0.0
    %82 = vmatpush1.msra.mxu0 %v36
    %83 = vmatprep.subr.mxu0 0.0
    %84 = vmatpush1.msra.mxu0 %v37
    %85 = vmatprep.subr.mxu0 0.0
    %86 = vmatpush1.msra.mxu0 %v38
    %87 = vmatprep.subr.mxu0 0.0
    %88 = vmatpush1.msra.mxu0 %v39
    %89 = vmatprep.subr.mxu0 0.0
    %90 = vmatpush1.msra.mxu0 %v40
    %91 = vmatprep.subr.mxu0 0.0
    %92 = vmatpush1.msra.mxu0 %v41
    %93 = vmatprep.subr.mxu0 0.0
    %94 = vmatpush1.msra.mxu0 %v42
    %95 = vmatprep.subr.mxu0 0.0
    %96 = vmatpush1.msra.mxu0 %v43
    %97 = vmatprep.subr.mxu0 0.0
    %98 = vmatpush1.msra.mxu0 %v44
    %99 = vmatprep.subr.mxu0 0.0
    %100 = vmatpush1.msra.mxu0 %v45
    %101 = vmatprep.subr.mxu0 0.0
    %102 = vmatpush1.msra.mxu0 %v46
    %103 = vmatprep.subr.mxu0 0.0
    %104 = vmatpush1.msra.mxu0 %v47
    %105 = vmatprep.subr.mxu0 0.0
    %106 = vmatpush1.msra.mxu0 %v48
    %107 = vmatprep.subr.mxu0 0.0
    %108 = vmatpush1.msra.mxu0 %v49
    %109 = vmatprep.subr.mxu0 0.0
    %110 = vmatpush1.msra.mxu0 %v50
    %111 = vmatprep.subr.mxu0 0.0
    %112 = vmatpush1.msra.mxu0 %v51
    %113 = vmatprep.subr.mxu0 0.0
    %114 = vmatpush1.msra.mxu0 %v52
    %115 = vmatprep.subr.mxu0 0.0
    %116 = vmatpush1.msra.mxu0 %v53
    %117 = vmatprep.subr.mxu0 0.0
    %118 = vmatpush1.msra.mxu0 %v54
    %119 = vmatprep.subr.mxu0 0.0
    %120 = vmatpush1.msra.mxu0 %v55
    %121 = vmatprep.subr.mxu0 0.0
    %122 = vmatpush1.msra.mxu0 %v56
    %123 = vmatprep.subr.mxu0 0.0
    %124 = vmatpush1.msra.mxu0 %v57
    %125 = vmatprep.subr.mxu0 0.0
    %126 = vmatpush1.msra.mxu0 %v58
    %127 = vmatprep.subr.mxu0 0.0
    %128 = vmatpush1.msra.mxu0 %v59
    %129 = vmatprep.subr.mxu0 0.0
    %130 = vmatpush1.msra.mxu0 %v60
    %131 = vmatprep.subr.mxu0 0.0
    %132 = vmatpush1.msra.mxu0 %v61
    %133 = vmatprep.mubr.f32.mxu0 %v29
    %134 = vmatmul.mubr.f32.gmra.mrb[0].mxu0 %v28
    %v135 = vpop.f32.mrb[0].mxu0
    %v136 = vadd.f32 %v67, %v135
    %v137 = vpop.f32.mrb[0].mxu0
    %138 = vdwg.mxu0
    %v139 = vsub.f32 0.0, %v136
    %v140 = vmul.f32 %v139, 1.442695
    %v141 = vpow.pop %v140
    %v142 = vadd.f32 %v141, 1.0
    %v143 = vrcp.pop %v142
    %144 = vst [vmem:[%s3] sm:$0xff] %v143
    // Predicated region
    $region18: #{forward.1} parent=1 // pred_check
      _
    $region19: #{forward.1} parent=1 // pred_check_branch
      %146 = sbr.rel (0) target = $region21
    $region20: #{forward.1} parent=1 // pred_region
      _
    $region21: #{forward.1} parent=1 // pred_fallthru
      _
    // Predicated region
    $region22: #{forward.1} parent=1 // pred_check
      _
    $region23: #{forward.1} parent=1 // pred_check_branch
      %148 = sbr.rel (0) target = $region25
    $region24: #{forward.1} parent=1 // pred_region
      _
    $region25: #{forward.1} parent=1 // pred_fallthru
      _
    %149 = vsyncpa [#allocation3], 1

</llo_original>
